<compile_context>
chip_gen: v7x
topology: tpu7x:2x2x1
jax: 0.10.0
libtpu: 0.0.40
codegen_flags: <defaults>
</compile_context>

<pallas_src>
import functools
import math

import jax
import jax.numpy as jnp
from jax import lax
from jax.experimental import pallas as pl
from jax.experimental.pallas import tpu as pltpu


def _round_up(v, mult):
    return ((v + mult - 1) // mult) * mult


def _position_embedding_kernel(x_ref, w1_ref, w2_ref, o_ref):
    # x_ref : (TM, in_dim)        row tile of the flattened input
    # w1_ref: (out_dim, in_dim)   resident (constant block index), PyTorch layout
    # w2_ref: (out_dim, out_dim)  resident (constant block index), PyTorch layout
    # o_ref : (TM, out_dim)
    x = x_ref[...]
    # h = x @ w1.T  (contraction on dim 1 of both operands -> no wrapper transpose)
    h = lax.dot_general(x, w1_ref[...], (((1,), (1,)), ((), ())),
                        preferred_element_type=jnp.float32)
    h = jnp.maximum(h, 0.0)
    # y = h @ w2.T
    y = lax.dot_general(h, w2_ref[...], (((1,), (1,)), ((), ())),
                        preferred_element_type=jnp.float32)
    o_ref[...] = y.astype(o_ref.dtype)


@functools.partial(jax.jit, static_argnames=("tm", "out_dtype"))
def position_embedding(x, w1, w2, *, tm=4096, out_dtype=None):
    """Fused forward of PositionEmbedding: relu(x @ w1.T) @ w2.T.

    x:  (..., in_dim) float32
    w1: (out_dim, in_dim)  float32   (position_embedding_1.weight, PyTorch layout)
    w2: (out_dim, out_dim) float32   (position_embedding_2.weight, PyTorch layout)
    out_dtype: output dtype (default: x.dtype). Pass jnp.bfloat16 to halve the
               dominant HBM write traffic if the consumer accepts bf16.
    returns (..., out_dim)
    """
    *lead, in_dim = x.shape
    out_dim = w1.shape[0]
    m = math.prod(lead) if lead else 1
    out_dtype = x.dtype if out_dtype is None else out_dtype

    if m == 0:  # empty batch: avoid a zero-sized grid
        return jnp.zeros((*lead, out_dim), out_dtype)

    x2 = x.reshape(m, in_dim)  # free: row-major, no data movement

    # Row tile: as large as possible (amortize ~0.35 us/step overhead), but
    # capped so the parallel grid axis keeps >= 2 steps (v7x has 2 TCs) and is
    # a multiple of 256 rows. Tiny problems fall back to one full-extent block.
    tm_eff = min(tm, _round_up(pl.cdiv(m, 2), 256))
    if tm_eff >= m:
        tm_eff = m
    grid = (pl.cdiv(m, tm_eff),)

    flops = 2 * m * (in_dim + out_dim) * out_dim
    bytes_accessed = (m * in_dim * x.dtype.itemsize
                      + out_dim * in_dim * w1.dtype.itemsize
                      + out_dim * out_dim * w2.dtype.itemsize
                      + m * out_dim * jnp.dtype(out_dtype).itemsize)

    out2 = pl.pallas_call(
        _position_embedding_kernel,
        out_shape=jax.ShapeDtypeStruct((m, out_dim), out_dtype),
        grid_spec=pltpu.PrefetchScalarGridSpec(
            num_scalar_prefetch=0,
            grid=grid,
            in_specs=[
                pl.BlockSpec((tm_eff, in_dim), lambda i: (i, 0)),
                pl.BlockSpec((out_dim, in_dim), lambda i: (0, 0)),
                pl.BlockSpec((out_dim, out_dim), lambda i: (0, 0)),
            ],
            out_specs=pl.BlockSpec((tm_eff, out_dim), lambda i: (i, 0)),
        ),
        compiler_params=pltpu.CompilerParams(
            dimension_semantics=("parallel",),
        ),
        cost_estimate=pl.CostEstimate(
            flops=flops, transcendentals=0, bytes_accessed=bytes_accessed),
    )(x2, w1, w2)

    return out2.reshape(*lead, out_dim) if lead else out2.reshape(out_dim)


if __name__ == "__main__":
    # Small shapes consistent with the module: per-node position features with
    # a small in_dim, embedded to the model hidden width.
    B, NODES, IN_DIM, OUT_DIM = 2, 512, 4, 128   # M = 1024 rows -> 2 grid steps

    key = jax.random.PRNGKey(0)
    kx, k1, k2 = jax.random.split(key, 3)

    x = jax.random.normal(kx, (B, NODES, IN_DIM), dtype=jnp.float32)

    # Deterministic init mimicking PyTorch Linear's uniform fan-in bound.
    b1 = 1.0 / (IN_DIM ** 0.5)
    w1 = jax.random.uniform(k1, (OUT_DIM, IN_DIM), jnp.float32, -b1, b1)
    b2 = 1.0 / (OUT_DIM ** 0.5)
    w2 = jax.random.uniform(k2, (OUT_DIM, OUT_DIM), jnp.float32, -b2, b2)

    # Pure-JAX reference (same math as the PyTorch module).
    ref = jnp.maximum(jnp.einsum("bni,oi->bno", x, w1), 0.0)
    ref = jnp.einsum("bno,po->bnp", ref, w2)

    # f32 output path.
    out = position_embedding(x, w1, w2)
    out = jax.block_until_ready(out)
    assert out.shape == (B, NODES, OUT_DIM)
    assert jnp.allclose(out, ref, atol=2e-3, rtol=2e-3), float(
        jnp.max(jnp.abs(out - ref)))

    # bf16 output path (halved HBM write traffic); looser tolerance.
    out_bf16 = position_embedding(x, w1, w2, out_dtype=jnp.bfloat16)
    out_bf16 = jax.block_until_ready(out_bf16)
    assert out_bf16.dtype == jnp.bfloat16
    assert jnp.allclose(out_bf16.astype(jnp.float32), ref, atol=5e-2, rtol=5e-2), \
        float(jnp.max(jnp.abs(out_bf16.astype(jnp.float32) - ref)))

    print("KERNEL_OK")
</pallas_src>

<mosaic_0001>
module attributes {stable_mosaic.version = 11 : i64} {
  func.func @_position_embedding_kernel(%arg0: i32, %arg1: memref<512x4xf32, #tpu.memory_space<vmem>>, %arg2: memref<128x4xf32, #tpu.memory_space<vmem>>, %arg3: memref<128x128xf32, #tpu.memory_space<vmem>>, %arg4: memref<512x128xf32, #tpu.memory_space<vmem>>) attributes {dimension_semantics = [#tpu.dimension_semantics<parallel>], iteration_bounds = array<i64: 2>, scalar_prefetch = 0 : i64, scratch_operands = 0 : i64, tpu.core_type = #tpu.core_type<tc>, window_params = [{transform_indices = @transform_0, window_bounds = array<i64: 512, 4>}, {pipeline_mode = #tpu.pipeline_mode<synchronous>, transform_indices = @transform_1, window_bounds = array<i64: 128, 4>}, {pipeline_mode = #tpu.pipeline_mode<synchronous>, transform_indices = @transform_2, window_bounds = array<i64: 128, 128>}, {transform_indices = @transform_3, window_bounds = array<i64: 512, 128>}]} {
    %c0 = arith.constant 0 : index
    %c0_0 = arith.constant 0 : index
    %0 = vector.load %arg1[%c0, %c0_0] : memref<512x4xf32, #tpu.memory_space<vmem>>, vector<512x4xf32>
    %c0_1 = arith.constant 0 : index
    %c0_2 = arith.constant 0 : index
    %1 = vector.load %arg2[%c0_1, %c0_2] : memref<128x4xf32, #tpu.memory_space<vmem>>, vector<128x4xf32>
    %cst = arith.constant dense<0.000000e+00> : vector<512x128xf32>
    %2 = tpu.matmul %0, %1, %cst {dimension_numbers = #tpu.dot_dimension_numbers<[1], [1], [0], [0], [0, 0, 1, 0], [], []>} : vector<512x4xf32>, vector<128x4xf32>, vector<512x128xf32> -> vector<512x128xf32>
    %cst_3 = arith.constant 0.000000e+00 : f32
    %3 = vector.broadcast %cst_3 : f32 to vector<512x128xf32>
    %4 = arith.maximumf %2, %3 : vector<512x128xf32>
    %c0_4 = arith.constant 0 : index
    %c0_5 = arith.constant 0 : index
    %5 = vector.load %arg3[%c0_4, %c0_5] : memref<128x128xf32, #tpu.memory_space<vmem>>, vector<128x128xf32>
    %cst_6 = arith.constant dense<0.000000e+00> : vector<512x128xf32>
    %6 = tpu.matmul %4, %5, %cst_6 {dimension_numbers = #tpu.dot_dimension_numbers<[1], [1], [0], [0], [0, 0, 1, 0], [], []>} : vector<512x128xf32>, vector<128x128xf32>, vector<512x128xf32> -> vector<512x128xf32>
    %c0_7 = arith.constant 0 : index
    %c0_8 = arith.constant 0 : index
    %7 = vector.load %arg4[%c0_7, %c0_8] : memref<512x128xf32, #tpu.memory_space<vmem>>, vector<512x128xf32>
    tpu.vector_store %arg4[%c0_7, %c0_8], %6 {strides = array<i32>} : memref<512x128xf32, #tpu.memory_space<vmem>>, vector<512x128xf32>,
    return
  }
  func.func @transform_0(%arg0: i32) -> (i32, i32) {
    %c0_i32 = arith.constant 0 : i32
    %c0_i32_0 = arith.constant 0 : i32
    return %arg0, %c0_i32 : i32, i32
  }
  func.func @transform_1(%arg0: i32) -> (i32, i32) {
    %c0_i32 = arith.constant 0 : i32
    %c0_i32_0 = arith.constant 0 : i32
    %c0_i32_1 = arith.constant 0 : i32
    return %c0_i32, %c0_i32_0 : i32, i32
  }
  func.func @transform_2(%arg0: i32) -> (i32, i32) {
    %c0_i32 = arith.constant 0 : i32
    %c0_i32_0 = arith.constant 0 : i32
    %c0_i32_1 = arith.constant 0 : i32
    return %c0_i32, %c0_i32_0 : i32, i32
  }
  func.func @transform_3(%arg0: i32) -> (i32, i32) {
    %c0_i32 = arith.constant 0 : i32
    %c0_i32_0 = arith.constant 0 : i32
    return %arg0, %c0_i32 : i32, i32
  }
}

</mosaic_0001>

<llo_original>
// kernel: position_embedding.1
$region0: #{position_embedding.1}
  #allocation0 [shape = 'u32[]', space=smem, size = 0x4, offset = 0x4, fixed_abs, tag = 'smem constant byte address 0x4 - core index']
  #allocation1 [shape = 'u32[144,128]{1,0:T(1,128)}', space=vmem, size = 0x12000, scoped, tag = 'internal scratch']
  %s0 = inlined_call_operand.vmem [shape: f32[1024,4], index: 0, kind: input, shape index: {}]
  %s1 = inlined_call_operand.vmem [shape: f32[128,4], index: 1, kind: input, shape index: {}]
  %s2 = inlined_call_operand.vmem [shape: f32[128,128], index: 2, kind: input, shape index: {}]
  %s3 = inlined_call_operand.hbm [shape: f32[1024,128], index: 3, kind: output, shape index: {}]
  %s4 = sld [smem:[#allocation0]]
  $region45: #{position_embedding.1} parent=0
    _
  %s6 = ssub.s32 1, %s4
  %s7 = scalar_select 0, %s6, %s4
  $region1: #{position_embedding.1} parent=0
    #allocation2 [shape = 'u8[524288]{0}', space=vmem, size = 0x80000, scoped, tag = 'output window, operand 0']
    #allocation3 [shape = 's32[2]{0}', space=sflag, size = 0x8, scoped, tag = 'scoped memory for position_embedding.1']
    %8 = vsyncpa [#allocation3], 0
    %s9 = scalar_lea.sflag [#allocation3], 1
    %10 = vsyncpa %s9, 0
    loop: start=0, step=1, limit=4
    $region2: #{position_embedding.1} parent=1 // loop_pre_header
      _
    $region3: #{position_embedding.1} parent=1 // loop_header
      %s12 = sphi 0, %s16
      %p13 = scmp.ge.s32.totalorder %s12, 4
      %s22 = sphi 0, %s24
      %s25 = sphi 0, %s22
      %s26 = sphi 0, %s25
      %s42 = sphi 0, %s26
      %s46 = sphi 0, %s46
      %s48 = sphi 0, %s46
      %s49 = sphi 0, %s48
      %s63 = sphi 0, %s49
      %s67 = sphi 0, %s67
      %s69 = sphi 0, %s67
      %s70 = sphi 0, %s69
      %s84 = sphi 0, %s70
      %s90 = sphi 0, %s92
      %s93 = sphi 0, %s90
      %s94 = sphi 0, %s93
      %s110 = sphi 0, %s94
    $region4: #{position_embedding.1} parent=1 // loop_header_branch
      %15 = sbr.rel (%p13) target = $region8
    $region5: #{position_embedding.1} parent=1 // loop_body
      %s17 = ssub.s32 %s12, 1
      %s18 = ssub.s32 %s12, 2
      %s19 = sadd.s32 %s12, 1
      %s20 = ssub.s32 %s12, %s19
      %p21 = scmp.eq.s32.totalorder %s20, 0
      %s23 = sadd.s32 %s22, 1
      %s24 = scalar_select %p21, %s22, %s23
      %p27 = pneg %p21
      %p28 = scmp.eq.s32.totalorder %s12, 1
      %p29 = por %p27, %p28
      %p30 = scmp.ne.s32.totalorder %s22, %s25
      %p31 = scmp.eq.s32.totalorder %s12, 0
      %p32 = por %p30, %p31
      %p33 = scmp.ne.s32.totalorder %s22, %s25
      %p34 = scmp.eq.s32.totalorder %s17, 1
      %p35 = por %p33, %p34
      %p36 = scmp.ne.s32.totalorder %s25, %s26
      %p37 = scmp.eq.s32.totalorder %s17, 0
      %p38 = por %p36, %p37
      %p39 = scmp.ne.s32.totalorder %s25, %s26
      %p40 = scmp.eq.s32.totalorder %s18, 1
      %p41 = por %p39, %p40
      %p43 = scmp.ne.s32.totalorder %s26, %s42
      %p44 = scmp.eq.s32.totalorder %s18, 0
      %p45 = por %p43, %p44
      %s47 = sadd.s32 %s46, 1
      %p50 = scmp.eq.s32.totalorder %s12, 1
      %p51 = scmp.ne.s32.totalorder %s46, %s48
      %p52 = scmp.eq.s32.totalorder %s12, 0
      %p53 = por %p51, %p52
      %p54 = scmp.ne.s32.totalorder %s46, %s48
      %p55 = scmp.eq.s32.totalorder %s17, 1
      %p56 = por %p54, %p55
      %p57 = scmp.ne.s32.totalorder %s48, %s49
      %p58 = scmp.eq.s32.totalorder %s17, 0
      %p59 = por %p57, %p58
      %p60 = scmp.ne.s32.totalorder %s48, %s49
      %p61 = scmp.eq.s32.totalorder %s18, 1
      %p62 = por %p60, %p61
      %p64 = scmp.ne.s32.totalorder %s49, %s63
      %p65 = scmp.eq.s32.totalorder %s18, 0
      %p66 = por %p64, %p65
      %s68 = sadd.s32 %s67, 1
      %p71 = scmp.eq.s32.totalorder %s12, 1
      %p72 = scmp.ne.s32.totalorder %s67, %s69
      %p73 = scmp.eq.s32.totalorder %s12, 0
      %p74 = por %p72, %p73
      %p75 = scmp.ne.s32.totalorder %s67, %s69
      %p76 = scmp.eq.s32.totalorder %s17, 1
      %p77 = por %p75, %p76
      %p78 = scmp.ne.s32.totalorder %s69, %s70
      %p79 = scmp.eq.s32.totalorder %s17, 0
      %p80 = por %p78, %p79
      %p81 = scmp.ne.s32.totalorder %s69, %s70
      %p82 = scmp.eq.s32.totalorder %s18, 1
      %p83 = por %p81, %p82
      %p85 = scmp.ne.s32.totalorder %s70, %s84
      %p86 = scmp.eq.s32.totalorder %s18, 0
      %p87 = por %p85, %p86
      %s88 = ssub.s32 %s12, %s19
      %p89 = scmp.eq.s32.totalorder %s88, 0
      %s91 = sadd.s32 %s90, 1
      %s92 = scalar_select %p89, %s90, %s91
      %p95 = pneg %p89
      %p96 = scmp.eq.s32.totalorder %s12, 1
      %p97 = por %p95, %p96
      %p98 = scmp.ne.s32.totalorder %s90, %s93
      %p99 = scmp.eq.s32.totalorder %s12, 0
      %p100 = por %p98, %p99
      %p101 = scmp.ne.s32.totalorder %s90, %s93
      %p102 = scmp.eq.s32.totalorder %s17, 1
      %p103 = por %p101, %p102
      %p104 = scmp.ne.s32.totalorder %s93, %s94
      %p105 = scmp.eq.s32.totalorder %s17, 0
      %p106 = por %p104, %p105
      %p107 = scmp.ne.s32.totalorder %s93, %s94
      %p108 = scmp.eq.s32.totalorder %s18, 1
      %p109 = por %p107, %p108
      %p111 = scmp.ne.s32.totalorder %s94, %s110
      %p112 = scmp.eq.s32.totalorder %s18, 0
      %p113 = por %p111, %p112
      %p114 = scmp.le.s32.totalorder 1, %s12
      %p115 = scmp.lt.s32.totalorder %s12, 3
      %p116 = pnand %p114, %p115
      %p117 = pneg %p116
      // Predicated region
      $region9: #{position_embedding.1} parent=5 // pred_check
        _
      $region10: #{position_embedding.1} parent=5 // pred_check_branch
        %119 = sbr.rel (%p116) target = $region12
      $region11: #{position_embedding.1} parent=5 // pred_region
        %s120 = ssub.s32 %s12, 1
        // Predicated region
        $region13: #{position_embedding.1} parent=11 // pred_check
          %p121 = pneg %p59
        $region14: #{position_embedding.1} parent=11 // pred_check_branch
          %123 = sbr.rel (%p121) target = $region16
        $region15: #{position_embedding.1} parent=11 // pred_region
          _
        $region16: #{position_embedding.1} parent=11 // pred_fallthru
          _
        // Predicated region
        $region17: #{position_embedding.1} parent=11 // pred_check
          %p124 = pneg %p80
        $region18: #{position_embedding.1} parent=11 // pred_check_branch
          %126 = sbr.rel (%p124) target = $region20
        $region19: #{position_embedding.1} parent=11 // pred_region
          _
        $region20: #{position_embedding.1} parent=11 // pred_fallthru
          _
      $region12: #{position_embedding.1} parent=5 // pred_fallthru
        _
      %p127 = scmp.lt.s32.totalorder %s12, 2
      // Predicated region
      $region21: #{position_embedding.1} parent=5 // pred_check
        %p128 = pneg %p127
      $region22: #{position_embedding.1} parent=5 // pred_check_branch
        %130 = sbr.rel (%p128) target = $region24
      $region23: #{position_embedding.1} parent=5 // pred_region
        // Predicated region
        $region25: #{position_embedding.1} parent=23 // pred_check
          %p131 = pneg %p32
        $region26: #{position_embedding.1} parent=23 // pred_check_branch
          %133 = sbr.rel (%p131) target = $region28
        $region27: #{position_embedding.1} parent=23 // pred_region
          %s134 = smul.u32 64, %s12
          %p135 = scmp.lt.s32.totalorder %s134, 127
          %s136 = scalar_select %p135, %s134, 127
          %s137 = smul.addr %s136, 8
          %s138 = scalar_lea.vmem %s0, %s137
          %s139 = smul.u32 64, %s12
        $region28: #{position_embedding.1} parent=23 // pred_fallthru
          _
      $region24: #{position_embedding.1} parent=5 // pred_fallthru
        _
      %p140 = scmp.le.s32.totalorder 1, %s12
      %p141 = scmp.lt.s32.totalorder %s12, 3
      %p142 = pnand %p140, %p141
      %p143 = pneg %p142
      // Predicated region
      $region29: #{position_embedding.1} parent=5 // pred_check
        _
      $region30: #{position_embedding.1} parent=5 // pred_check_branch
        %145 = sbr.rel (%p142) target = $region32
      $region31: #{position_embedding.1} parent=5 // pred_region
        %s146 = ssub.s32 %s12, 1
        %s147 = smul.u32 64, %s17
        %p148 = scmp.lt.s32.totalorder %s147, 127
        %s149 = scalar_select %p148, %s147, 127
        %s150 = smul.addr %s149, 8
        %s151 = scalar_lea.vmem %s0, %s150
        %p152 = pneg %p38
        %p153 = pneg %p35
        %p154 = pneg %p59
        %p155 = pneg %p56
        %p156 = pneg %p80
        %p157 = pneg %p77
        %p158 = pneg %p106
        %p159 = pneg %p103
        %s160 = sand.u32 %s93, 1
        %s161 = scalar_lea.sflag [#allocation3], %s160
        %s162 = sand.u32 %s93, 1
        %s163 = smul.addr %s162, 512
        %s164 = scalar_lea.vmem [#allocation2], %s163
        %s165 = smul.u32 64, %s17
        %p166 = scmp.lt.s32.totalorder %s165, 127
        %s167 = scalar_select %p166, %s165, 127
        %s168 = smul.addr %s167, 8
        %s169 = scalar_lea.vmem %s0, %s168
        %s170 = smul.u32 64, %s17
        %s171 = smul.u32 64, %s17
        %v172 = vld [vmem:[%s169] sm:$0xff]
        %v173 = vld [vmem:[%s169 + $0x8] sm:$0xff]
        %v174 = vld [vmem:[%s169 + $0x10] sm:$0xff]
        %v175 = vld [vmem:[%s169 + $0x18] sm:$0xff]
        %v176 = vld [vmem:[%s169 + $0x20] sm:$0xff]
        %v177 = vld [vmem:[%s169 + $0x28] sm:$0xff]
        %v178 = vld [vmem:[%s169 + $0x30] sm:$0xff]
        %v179 = vld [vmem:[%s169 + $0x38] sm:$0xff]
        %v180 = vld [vmem:[%s169 + $0x40] sm:$0xff]
        %v181 = vld [vmem:[%s169 + $0x48] sm:$0xff]
        %v182 = vld [vmem:[%s169 + $0x50] sm:$0xff]
        %v183 = vld [vmem:[%s169 + $0x58] sm:$0xff]
        %v184 = vld [vmem:[%s169 + $0x60] sm:$0xff]
        %v185 = vld [vmem:[%s169 + $0x68] sm:$0xff]
        %v186 = vld [vmem:[%s169 + $0x70] sm:$0xff]
        %v187 = vld [vmem:[%s169 + $0x78] sm:$0xff]
        %v188 = vld [vmem:[%s169 + $0x80] sm:$0xff]
        %v189 = vld [vmem:[%s169 + $0x88] sm:$0xff]
        %v190 = vld [vmem:[%s169 + $0x90] sm:$0xff]
        %v191 = vld [vmem:[%s169 + $0x98] sm:$0xff]
        %v192 = vld [vmem:[%s169 + $0xa0] sm:$0xff]
        %v193 = vld [vmem:[%s169 + $0xa8] sm:$0xff]
        %v194 = vld [vmem:[%s169 + $0xb0] sm:$0xff]
        %v195 = vld [vmem:[%s169 + $0xb8] sm:$0xff]
        %v196 = vld [vmem:[%s169 + $0xc0] sm:$0xff]
        %v197 = vld [vmem:[%s169 + $0xc8] sm:$0xff]
        %v198 = vld [vmem:[%s169 + $0xd0] sm:$0xff]
        %v199 = vld [vmem:[%s169 + $0xd8] sm:$0xff]
        %v200 = vld [vmem:[%s169 + $0xe0] sm:$0xff]
        %v201 = vld [vmem:[%s169 + $0xe8] sm:$0xff]
        %v202 = vld [vmem:[%s169 + $0xf0] sm:$0xff]
        %v203 = vld [vmem:[%s169 + $0xf8] sm:$0xff]
        %v204 = vld [vmem:[%s169 + $0x100] sm:$0xff]
        %v205 = vld [vmem:[%s169 + $0x108] sm:$0xff]
        %v206 = vld [vmem:[%s169 + $0x110] sm:$0xff]
        %v207 = vld [vmem:[%s169 + $0x118] sm:$0xff]
        %v208 = vld [vmem:[%s169 + $0x120] sm:$0xff]
        %v209 = vld [vmem:[%s169 + $0x128] sm:$0xff]
        %v210 = vld [vmem:[%s169 + $0x130] sm:$0xff]
        %v211 = vld [vmem:[%s169 + $0x138] sm:$0xff]
        %v212 = vld [vmem:[%s169 + $0x140] sm:$0xff]
        %v213 = vld [vmem:[%s169 + $0x148] sm:$0xff]
        %v214 = vld [vmem:[%s169 + $0x150] sm:$0xff]
        %v215 = vld [vmem:[%s169 + $0x158] sm:$0xff]
        %v216 = vld [vmem:[%s169 + $0x160] sm:$0xff]
        %v217 = vld [vmem:[%s169 + $0x168] sm:$0xff]
        %v218 = vld [vmem:[%s169 + $0x170] sm:$0xff]
        %v219 = vld [vmem:[%s169 + $0x178] sm:$0xff]
        %v220 = vld [vmem:[%s169 + $0x180] sm:$0xff]
        %v221 = vld [vmem:[%s169 + $0x188] sm:$0xff]
        %v222 = vld [vmem:[%s169 + $0x190] sm:$0xff]
        %v223 = vld [vmem:[%s169 + $0x198] sm:$0xff]
        %v224 = vld [vmem:[%s169 + $0x1a0] sm:$0xff]
        %v225 = vld [vmem:[%s169 + $0x1a8] sm:$0xff]
        %v226 = vld [vmem:[%s169 + $0x1b0] sm:$0xff]
        %v227 = vld [vmem:[%s169 + $0x1b8] sm:$0xff]
        %v228 = vld [vmem:[%s169 + $0x1c0] sm:$0xff]
        %v229 = vld [vmem:[%s169 + $0x1c8] sm:$0xff]
        %v230 = vld [vmem:[%s169 + $0x1d0] sm:$0xff]
        %v231 = vld [vmem:[%s169 + $0x1d8] sm:$0xff]
        %v232 = vld [vmem:[%s169 + $0x1e0] sm:$0xff]
        %v233 = vld [vmem:[%s169 + $0x1e8] sm:$0xff]
        %v234 = vld [vmem:[%s169 + $0x1f0] sm:$0xff]
        %v235 = vld [vmem:[%s169 + $0x1f8] sm:$0xff]
        %v236 = vld [vmem:[%s1] sm:$0xff]
        %v237 = vld [vmem:[%s1 + $0x8] sm:$0xff]
        %v238 = vld [vmem:[%s1 + $0x10] sm:$0xff]
        %v239 = vld [vmem:[%s1 + $0x18] sm:$0xff]
        %v240 = vld [vmem:[%s1 + $0x20] sm:$0xff]
        %v241 = vld [vmem:[%s1 + $0x28] sm:$0xff]
        %v242 = vld [vmem:[%s1 + $0x30] sm:$0xff]
        %v243 = vld [vmem:[%s1 + $0x38] sm:$0xff]
        %v244 = vld [vmem:[%s1 + $0x40] sm:$0xff]
        %v245 = vld [vmem:[%s1 + $0x48] sm:$0xff]
        %v246 = vld [vmem:[%s1 + $0x50] sm:$0xff]
        %v247 = vld [vmem:[%s1 + $0x58] sm:$0xff]
        %v248 = vld [vmem:[%s1 + $0x60] sm:$0xff]
        %v249 = vld [vmem:[%s1 + $0x68] sm:$0xff]
        %v250 = vld [vmem:[%s1 + $0x70] sm:$0xff]
        %v251 = vld [vmem:[%s1 + $0x78] sm:$0xff]
        %vm252 = vcmask 31744
        %v254 = vsel %vm252, %v172, 0
        %v257 = vsel %vm252, %v173, 0
        %v260 = vsel %vm252, %v174, 0
        %v263 = vsel %vm252, %v175, 0
        %v266 = vsel %vm252, %v176, 0
        %v269 = vsel %vm252, %v177, 0
        %v272 = vsel %vm252, %v178, 0
        %v275 = vsel %vm252, %v179, 0
        %v278 = vsel %vm252, %v180, 0
        %v281 = vsel %vm252, %v181, 0
        %v284 = vsel %vm252, %v182, 0
        %v287 = vsel %vm252, %v183, 0
        %v290 = vsel %vm252, %v184, 0
        %v293 = vsel %vm252, %v185, 0
        %v296 = vsel %vm252, %v186, 0
        %v299 = vsel %vm252, %v187, 0
        %v302 = vsel %vm252, %v188, 0
        %v305 = vsel %vm252, %v189, 0
        %v308 = vsel %vm252, %v190, 0
        %v311 = vsel %vm252, %v191, 0
        %v314 = vsel %vm252, %v192, 0
        %v317 = vsel %vm252, %v193, 0
        %v320 = vsel %vm252, %v194, 0
        %v323 = vsel %vm252, %v195, 0
        %v326 = vsel %vm252, %v196, 0
        %v329 = vsel %vm252, %v197, 0
        %v332 = vsel %vm252, %v198, 0
        %v335 = vsel %vm252, %v199, 0
        %v338 = vsel %vm252, %v200, 0
        %v341 = vsel %vm252, %v201, 0
        %v344 = vsel %vm252, %v202, 0
        %v347 = vsel %vm252, %v203, 0
        %v350 = vsel %vm252, %v204, 0
        %v353 = vsel %vm252, %v205, 0
        %v356 = vsel %vm252, %v206, 0
        %v359 = vsel %vm252, %v207, 0
        %v362 = vsel %vm252, %v208, 0
        %v365 = vsel %vm252, %v209, 0
        %v368 = vsel %vm252, %v210, 0
        %v371 = vsel %vm252, %v211, 0
        %v374 = vsel %vm252, %v212, 0
        %v377 = vsel %vm252, %v213, 0
        %v380 = vsel %vm252, %v214, 0
        %v383 = vsel %vm252, %v215, 0
        %v386 = vsel %vm252, %v216, 0
        %v389 = vsel %vm252, %v217, 0
        %v392 = vsel %vm252, %v218, 0
        %v395 = vsel %vm252, %v219, 0
        %v398 = vsel %vm252, %v220, 0
        %v401 = vsel %vm252, %v221, 0
        %v404 = vsel %vm252, %v222, 0
        %v407 = vsel %vm252, %v223, 0
        %v410 = vsel %vm252, %v224, 0
        %v413 = vsel %vm252, %v225, 0
        %v416 = vsel %vm252, %v226, 0
        %v419 = vsel %vm252, %v227, 0
        %v422 = vsel %vm252, %v228, 0
        %v425 = vsel %vm252, %v229, 0
        %v428 = vsel %vm252, %v230, 0
        %v431 = vsel %vm252, %v231, 0
        %v434 = vsel %vm252, %v232, 0
        %v437 = vsel %vm252, %v233, 0
        %v440 = vsel %vm252, %v234, 0
        %v443 = vsel %vm252, %v235, 0
        %v446 = vsel %vm252, %v236, 0
        %v449 = vsel %vm252, %v237, 0
        %v452 = vsel %vm252, %v238, 0
        %v455 = vsel %vm252, %v239, 0
        %v458 = vsel %vm252, %v240, 0
        %v461 = vsel %vm252, %v241, 0
        %v464 = vsel %vm252, %v242, 0
        %v467 = vsel %vm252, %v243, 0
        %v470 = vsel %vm252, %v244, 0
        %v473 = vsel %vm252, %v245, 0
        %v476 = vsel %vm252, %v246, 0
        %v479 = vsel %vm252, %v247, 0
        %v482 = vsel %vm252, %v248, 0
        %v485 = vsel %vm252, %v249, 0
        %v488 = vsel %vm252, %v250, 0
        %v491 = vsel %vm252, %v251, 0
        %493 = vmatprep.subr.mxu0 0.0
        %494 = vmatpush1.xpose.msra.mxu0 %v446
        %495 = vmatprep.subr.mxu0 0.0
        %496 = vmatpush1.xpose.msra.mxu0 %v449
        %497 = vmatprep.subr.mxu0 0.0
        %498 = vmatpush1.xpose.msra.mxu0 %v452
        %499 = vmatprep.subr.mxu0 0.0
        %500 = vmatpush1.xpose.msra.mxu0 %v455
        %501 = vmatprep.subr.mxu0 0.0
        %502 = vmatpush1.xpose.msra.mxu0 %v458
        %503 = vmatprep.subr.mxu0 0.0
        %504 = vmatpush1.xpose.msra.mxu0 %v461
        %505 = vmatprep.subr.mxu0 0.0
        %506 = vmatpush1.xpose.msra.mxu0 %v464
        %507 = vmatprep.subr.mxu0 0.0
        %508 = vmatpush1.xpose.msra.mxu0 %v467
        %509 = vmatprep.subr.mxu0 0.0
        %510 = vmatpush1.xpose.msra.mxu0 %v470
        %511 = vmatprep.subr.mxu0 0.0
        %512 = vmatpush1.xpose.msra.mxu0 %v473
        %513 = vmatprep.subr.mxu0 0.0
        %514 = vmatpush1.xpose.msra.mxu0 %v476
        %515 = vmatprep.subr.mxu0 0.0
        %516 = vmatpush1.xpose.msra.mxu0 %v479
        %517 = vmatprep.subr.mxu0 0.0
        %518 = vmatpush1.xpose.msra.mxu0 %v482
        %519 = vmatprep.subr.mxu0 0.0
        %520 = vmatpush1.xpose.msra.mxu0 %v485
        %521 = vmatprep.subr.mxu0 0.0
        %522 = vmatpush1.xpose.msra.mxu0 %v488
        %523 = vmatprep.subr.mxu0 0.0
        %524 = vmatpush1.xpose.msra.mxu0 %v491
        %525 = vmatprep.subr.mxu0 0.0
        %526 = vmatpush1.xpose.msra.mxu0 0.0
        %527 = vmatprep.subr.mxu0 0.0
        %528 = vmatpush1.xpose.msra.mxu0 0.0
        %529 = vmatprep.subr.mxu0 0.0
        %530 = vmatpush1.xpose.msra.mxu0 0.0
        %531 = vmatprep.subr.mxu0 0.0
        %532 = vmatpush1.xpose.msra.mxu0 0.0
        %533 = vmatprep.subr.mxu0 0.0
        %534 = vmatpush1.xpose.msra.mxu0 0.0
        %535 = vmatprep.subr.mxu0 0.0
        %536 = vmatpush1.xpose.msra.mxu0 0.0
        %537 = vmatprep.subr.mxu0 0.0
        %538 = vmatpush1.xpose.msra.mxu0 0.0
        %539 = vmatprep.subr.mxu0 0.0
        %540 = vmatpush1.xpose.msra.mxu0 0.0
        %541 = vmatprep.subr.mxu0 0.0
        %542 = vmatpush1.xpose.msra.mxu0 0.0
        %543 = vmatprep.subr.mxu0 0.0
        %544 = vmatpush1.xpose.msra.mxu0 0.0
        %545 = vmatprep.subr.mxu0 0.0
        %546 = vmatpush1.xpose.msra.mxu0 0.0
        %547 = vmatprep.subr.mxu0 0.0
        %548 = vmatpush1.xpose.msra.mxu0 0.0
        %549 = vmatprep.subr.mxu0 0.0
        %550 = vmatpush1.xpose.msra.mxu0 0.0
        %551 = vmatprep.subr.mxu0 0.0
        %552 = vmatpush1.xpose.msra.mxu0 0.0
        %553 = vmatprep.subr.mxu0 0.0
        %554 = vmatpush1.xpose.msra.mxu0 0.0
        %555 = vmatprep.subr.mxu0 0.0
        %556 = vmatpush1.xpose.msra.mxu0 0.0
        %557 = vmatprep.mubr.f32.mxu0 0.0
        %558 = vmatmul.mubr.f32.gmra.mrb[0].mxu0 %v254
        %v559 = vpop.f32.mrb[0].mxu0
        %v560 = vadd.f32 0.0, %v559
        %v561 = vpop.f32.mrb[0].mxu0
        %562 = vmatprep.mubr.f32.mxu0 0.0
        %563 = vmatmul.mubr.f32.gmra.mrb[0].mxu0 %v257
        %v564 = vpop.f32.mrb[0].mxu0
        %v565 = vadd.f32 0.0, %v564
        %v566 = vpop.f32.mrb[0].mxu0
        %567 = vmatprep.mubr.f32.mxu0 0.0
        %568 = vmatmul.mubr.f32.gmra.mrb[0].mxu0 %v260
        %v569 = vpop.f32.mrb[0].mxu0
        %v570 = vadd.f32 0.0, %v569
        %v571 = vpop.f32.mrb[0].mxu0
        %572 = vmatprep.mubr.f32.mxu0 0.0
        %573 = vmatmul.mubr.f32.gmra.mrb[0].mxu0 %v263
        %v574 = vpop.f32.mrb[0].mxu0
        %v575 = vadd.f32 0.0, %v574
        %v576 = vpop.f32.mrb[0].mxu0
        %577 = vmatprep.mubr.f32.mxu0 0.0
        %578 = vmatmul.mubr.f32.gmra.mrb[0].mxu0 %v266
        %v579 = vpop.f32.mrb[0].mxu0
        %v580 = vadd.f32 0.0, %v579
        %v581 = vpop.f32.mrb[0].mxu0
        %582 = vmatprep.mubr.f32.mxu0 0.0
        %583 = vmatmul.mubr.f32.gmra.mrb[0].mxu0 %v269
        %v584 = vpop.f32.mrb[0].mxu0
        %v585 = vadd.f32 0.0, %v584
        %v586 = vpop.f32.mrb[0].mxu0
        %587 = vmatprep.mubr.f32.mxu0 0.0
        %588 = vmatmul.mubr.f32.gmra.mrb[0].mxu0 %v272
        %v589 = vpop.f32.mrb[0].mxu0
        %v590 = vadd.f32 0.0, %v589
        %v591 = vpop.f32.mrb[0].mxu0
        %592 = vmatprep.mubr.f32.mxu0 0.0
        %593 = vmatmul.mubr.f32.gmra.mrb[0].mxu0 %v275
        %v594 = vpop.f32.mrb[0].mxu0
        %v595 = vadd.f32 0.0, %v594
        %v596 = vpop.f32.mrb[0].mxu0
        %597 = vmatprep.mubr.f32.mxu0 0.0
        %598 = vmatmul.mubr.f32.gmra.mrb[0].mxu0 %v278
        %v599 = vpop.f32.mrb[0].mxu0
        %v600 = vadd.f32 0.0, %v599
        %v601 = vpop.f32.mrb[0].mxu0
        %602 = vmatprep.mubr.f32.mxu0 0.0
        %603 = vmatmul.mubr.f32.gmra.mrb[0].mxu0 %v281
        %v604 = vpop.f32.mrb[0].mxu0
        %v605 = vadd.f32 0.0, %v604
        %v606 = vpop.f32.mrb[0].mxu0
        %607 = vmatprep.mubr.f32.mxu0 0.0
        %608 = vmatmul.mubr.f32.gmra.mrb[0].mxu0 %v284
        %v609 = vpop.f32.mrb[0].mxu0
        %v610 = vadd.f32 0.0, %v609
        %v611 = vpop.f32.mrb[0].mxu0
        %612 = vmatprep.mubr.f32.mxu0 0.0
        %613 = vmatmul.mubr.f32.gmra.mrb[0].mxu0 %v287
        %v614 = vpop.f32.mrb[0].mxu0
        %v615 = vadd.f32 0.0, %v614
        %v616 = vpop.f32.mrb[0].mxu0
        %617 = vmatprep.mubr.f32.mxu0 0.0
        %618 = vmatmul.mubr.f32.gmra.mrb[0].mxu0 %v290
        %v619 = vpop.f32.mrb[0].mxu0
        %v620 = vadd.f32 0.0, %v619
        %v621 = vpop.f32.mrb[0].mxu0
        %622 = vmatprep.mubr.f32.mxu0 0.0
        %623 = vmatmul.mubr.f32.gmra.mrb[0].mxu0 %v293
        %v624 = vpop.f32.mrb[0].mxu0
        %v625 = vadd.f32 0.0, %v624
        %v626 = vpop.f32.mrb[0].mxu0
        %627 = vmatprep.mubr.f32.mxu0 0.0
        %628 = vmatmul.mubr.f32.gmra.mrb[0].mxu0 %v296
        %v629 = vpop.f32.mrb[0].mxu0
        %v630 = vadd.f32 0.0, %v629
        %v631 = vpop.f32.mrb[0].mxu0
        %632 = vmatprep.mubr.f32.mxu0 0.0
        %633 = vmatmul.mubr.f32.gmra.mrb[0].mxu0 %v299
        %v634 = vpop.f32.mrb[0].mxu0
        %v635 = vadd.f32 0.0, %v634
        %v636 = vpop.f32.mrb[0].mxu0
        %637 = vmatprep.mubr.f32.mxu0 0.0
        %638 = vmatmul.mubr.f32.gmra.mrb[0].mxu0 %v302
        %v639 = vpop.f32.mrb[0].mxu0
        %v640 = vadd.f32 0.0, %v639
        %v641 = vpop.f32.mrb[0].mxu0
        %642 = vmatprep.mubr.f32.mxu0 0.0
        %643 = vmatmul.mubr.f32.gmra.mrb[0].mxu0 %v305
        %v644 = vpop.f32.mrb[0].mxu0
        %v645 = vadd.f32 0.0, %v644
        %v646 = vpop.f32.mrb[0].mxu0
        %647 = vmatprep.mubr.f32.mxu0 0.0
        %648 = vmatmul.mubr.f32.gmra.mrb[0].mxu0 %v308
        %v649 = vpop.f32.mrb[0].mxu0
        %v650 = vadd.f32 0.0, %v649
        %v651 = vpop.f32.mrb[0].mxu0
        %652 = vmatprep.mubr.f32.mxu0 0.0
        %653 = vmatmul.mubr.f32.gmra.mrb[0].mxu0 %v311
        %v654 = vpop.f32.mrb[0].mxu0
        %v655 = vadd.f32 0.0, %v654
        %v656 = vpop.f32.mrb[0].mxu0
        %657 = vmatprep.mubr.f32.mxu0 0.0
        %658 = vmatmul.mubr.f32.gmra.mrb[0].mxu0 %v314
        %v659 = vpop.f32.mrb[0].mxu0
        %v660 = vadd.f32 0.0, %v659
        %v661 = vpop.f32.mrb[0].mxu0
        %662 = vmatprep.mubr.f32.mxu0 0.0
        %663 = vmatmul.mubr.f32.gmra.mrb[0].mxu0 %v317
        %v664 = vpop.f32.mrb[0].mxu0
        %v665 = vadd.f32 0.0, %v664
        %v666 = vpop.f32.mrb[0].mxu0
        %667 = vmatprep.mubr.f32.mxu0 0.0
        %668 = vmatmul.mubr.f32.gmra.mrb[0].mxu0 %v320
        %v669 = vpop.f32.mrb[0].mxu0
        %v670 = vadd.f32 0.0, %v669
        %v671 = vpop.f32.mrb[0].mxu0
        %672 = vmatprep.mubr.f32.mxu0 0.0
        %673 = vmatmul.mubr.f32.gmra.mrb[0].mxu0 %v323
        %v674 = vpop.f32.mrb[0].mxu0
        %v675 = vadd.f32 0.0, %v674
        %v676 = vpop.f32.mrb[0].mxu0
        %677 = vmatprep.mubr.f32.mxu0 0.0
        %678 = vmatmul.mubr.f32.gmra.mrb[0].mxu0 %v326
        %v679 = vpop.f32.mrb[0].mxu0
        %v680 = vadd.f32 0.0, %v679
        %v681 = vpop.f32.mrb[0].mxu0
        %682 = vmatprep.mubr.f32.mxu0 0.0
        %683 = vmatmul.mubr.f32.gmra.mrb[0].mxu0 %v329
        %v684 = vpop.f32.mrb[0].mxu0
        %v685 = vadd.f32 0.0, %v684
        %v686 = vpop.f32.mrb[0].mxu0
        %687 = vmatprep.mubr.f32.mxu0 0.0
        %688 = vmatmul.mubr.f32.gmra.mrb[0].mxu0 %v332
        %v689 = vpop.f32.mrb[0].mxu0
        %v690 = vadd.f32 0.0, %v689
        %v691 = vpop.f32.mrb[0].mxu0
        %692 = vmatprep.mubr.f32.mxu0 0.0
        %693 = vmatmul.mubr.f32.gmra.mrb[0].mxu0 %v335
        %v694 = vpop.f32.mrb[0].mxu0
        %v695 = vadd.f32 0.0, %v694
        %v696 = vpop.f32.mrb[0].mxu0
        %697 = vmatprep.mubr.f32.mxu0 0.0
        %698 = vmatmul.mubr.f32.gmra.mrb[0].mxu0 %v338
        %v699 = vpop.f32.mrb[0].mxu0
        %v700 = vadd.f32 0.0, %v699
        %v701 = vpop.f32.mrb[0].mxu0
        %702 = vmatprep.mubr.f32.mxu0 0.0
        %703 = vmatmul.mubr.f32.gmra.mrb[0].mxu0 %v341
        %v704 = vpop.f32.mrb[0].mxu0
        %v705 = vadd.f32 0.0, %v704
        %v706 = vpop.f32.mrb[0].mxu0
        %707 = vmatprep.mubr.f32.mxu0 0.0
        %708 = vmatmul.mubr.f32.gmra.mrb[0].mxu0 %v344
        %v709 = vpop.f32.mrb[0].mxu0
        %v710 = vadd.f32 0.0, %v709
        %v711 = vpop.f32.mrb[0].mxu0
        %712 = vmatprep.mubr.f32.mxu0 0.0
        %713 = vmatmul.mubr.f32.gmra.mrb[0].mxu0 %v347
        %v714 = vpop.f32.mrb[0].mxu0
        %v715 = vadd.f32 0.0, %v714
        %v716 = vpop.f32.mrb[0].mxu0
        %717 = vmatprep.mubr.f32.mxu0 0.0
        %718 = vmatmul.mubr.f32.gmra.mrb[0].mxu0 %v350
        %v719 = vpop.f32.mrb[0].mxu0
        %v720 = vadd.f32 0.0, %v719
        %v721 = vpop.f32.mrb[0].mxu0
        %722 = vmatprep.mubr.f32.mxu0 0.0
        %723 = vmatmul.mubr.f32.gmra.mrb[0].mxu0 %v353
        %v724 = vpop.f32.mrb[0].mxu0
        %v725 = vadd.f32 0.0, %v724
        %v726 = vpop.f32.mrb[0].mxu0
        %727 = vmatprep.mubr.f32.mxu0 0.0
        %728 = vmatmul.mubr.f32.gmra.mrb[0].mxu0 %v356
        %v729 = vpop.f32.mrb[0].mxu0
        %v730 = vadd.f32 0.0, %v729
        %v731 = vpop.f32.mrb[0].mxu0
        %732 = vmatprep.mubr.f32.mxu0 0.0
        %733 = vmatmul.mubr.f32.gmra.mrb[0].mxu0 %v359
        %v734 = vpop.f32.mrb[0].mxu0
        %v735 = vadd.f32 0.0, %v734
        %v736 = vpop.f32.mrb[0].mxu0
        %737 = vmatprep.mubr.f32.mxu0 0.0
        %738 = vmatmul.mubr.f32.gmra.mrb[0].mxu0 %v362
        %v739 = vpop.f32.mrb[0].mxu0
        %v740 = vadd.f32 0.0, %v739
        %v741 = vpop.f32.mrb[0].mxu0
        %742 = vmatprep.mubr.f32.mxu0 0.0
        %743 = vmatmul.mubr.f32.gmra.mrb[0].mxu0 %v365
        %v744 = vpop.f32.mrb[0].mxu0
        %v745 = vadd.f32 0.0, %v744
        %v746 = vpop.f32.mrb[0].mxu0
        %747 = vmatprep.mubr.f32.mxu0 0.0
        %748 = vmatmul.mubr.f32.gmra.mrb[0].mxu0 %v368
        %v749 = vpop.f32.mrb[0].mxu0
        %v750 = vadd.f32 0.0, %v749
        %v751 = vpop.f32.mrb[0].mxu0
        %752 = vmatprep.mubr.f32.mxu0 0.0
        %753 = vmatmul.mubr.f32.gmra.mrb[0].mxu0 %v371
        %v754 = vpop.f32.mrb[0].mxu0
        %v755 = vadd.f32 0.0, %v754
        %v756 = vpop.f32.mrb[0].mxu0
        %757 = vmatprep.mubr.f32.mxu0 0.0
        %758 = vmatmul.mubr.f32.gmra.mrb[0].mxu0 %v374
        %v759 = vpop.f32.mrb[0].mxu0
        %v760 = vadd.f32 0.0, %v759
        %v761 = vpop.f32.mrb[0].mxu0
        %762 = vmatprep.mubr.f32.mxu0 0.0
        %763 = vmatmul.mubr.f32.gmra.mrb[0].mxu0 %v377
        %v764 = vpop.f32.mrb[0].mxu0
        %v765 = vadd.f32 0.0, %v764
        %v766 = vpop.f32.mrb[0].mxu0
        %767 = vmatprep.mubr.f32.mxu0 0.0
        %768 = vmatmul.mubr.f32.gmra.mrb[0].mxu0 %v380
        %v769 = vpop.f32.mrb[0].mxu0
        %v770 = vadd.f32 0.0, %v769
        %v771 = vpop.f32.mrb[0].mxu0
        %772 = vmatprep.mubr.f32.mxu0 0.0
        %773 = vmatmul.mubr.f32.gmra.mrb[0].mxu0 %v383
        %v774 = vpop.f32.mrb[0].mxu0
        %v775 = vadd.f32 0.0, %v774
        %v776 = vpop.f32.mrb[0].mxu0
        %777 = vmatprep.mubr.f32.mxu0 0.0
        %778 = vmatmul.mubr.f32.gmra.mrb[0].mxu0 %v386
        %v779 = vpop.f32.mrb[0].mxu0
        %v780 = vadd.f32 0.0, %v779
        %v781 = vpop.f32.mrb[0].mxu0
        %782 = vmatprep.mubr.f32.mxu0 0.0
        %783 = vmatmul.mubr.f32.gmra.mrb[0].mxu0 %v389
        %v784 = vpop.f32.mrb[0].mxu0
        %v785 = vadd.f32 0.0, %v784
        %v786 = vpop.f32.mrb[0].mxu0
        %787 = vmatprep.mubr.f32.mxu0 0.0
        %788 = vmatmul.mubr.f32.gmra.mrb[0].mxu0 %v392
        %v789 = vpop.f32.mrb[0].mxu0
        %v790 = vadd.f32 0.0, %v789
        %v791 = vpop.f32.mrb[0].mxu0
        %792 = vmatprep.mubr.f32.mxu0 0.0
        %793 = vmatmul.mubr.f32.gmra.mrb[0].mxu0 %v395
        %v794 = vpop.f32.mrb[0].mxu0
        %v795 = vadd.f32 0.0, %v794
        %v796 = vpop.f32.mrb[0].mxu0
        %797 = vmatprep.mubr.f32.mxu0 0.0
        %798 = vmatmul.mubr.f32.gmra.mrb[0].mxu0 %v398
        %v799 = vpop.f32.mrb[0].mxu0
        %v800 = vadd.f32 0.0, %v799
        %v801 = vpop.f32.mrb[0].mxu0
        %802 = vmatprep.mubr.f32.mxu0 0.0
        %803 = vmatmul.mubr.f32.gmra.mrb[0].mxu0 %v401
        %v804 = vpop.f32.mrb[0].mxu0
        %v805 = vadd.f32 0.0, %v804
        %v806 = vpop.f32.mrb[0].mxu0
        %807 = vmatprep.mubr.f32.mxu0 0.0
        %808 = vmatmul.mubr.f32.gmra.mrb[0].mxu0 %v404
        %v809 = vpop.f32.mrb[0].mxu0
        %v810 = vadd.f32 0.0, %v809
        %v811 = vpop.f32.mrb[0].mxu0
        %812 = vmatprep.mubr.f32.mxu0 0.0
        %813 = vmatmul.mubr.f32.gmra.mrb[0].mxu0 %v407
        %v814 = vpop.f32.mrb[0].mxu0
        %v815 = vadd.f32 0.0, %v814
        %v816 = vpop.f32.mrb[0].mxu0
        %817 = vmatprep.mubr.f32.mxu0 0.0
        %818 = vmatmul.mubr.f32.gmra.mrb[0].mxu0 %v410
        %v819 = vpop.f32.mrb[0].mxu0
        %v820 = vadd.f32 0.0, %v819
        %v821 = vpop.f32.mrb[0].mxu0
        %822 = vmatprep.mubr.f32.mxu0 0.0
        %823 = vmatmul.mubr.f32.gmra.mrb[0].mxu0 %v413
        %v824 = vpop.f32.mrb[0].mxu0
        %v825 = vadd.f32 0.0, %v824
        %v826 = vpop.f32.mrb[0].mxu0
        %827 = vmatprep.mubr.f32.mxu0 0.0
        %828 = vmatmul.mubr.f32.gmra.mrb[0].mxu0 %v416
        %v829 = vpop.f32.mrb[0].mxu0
        %v830 = vadd.f32 0.0, %v829
        %v831 = vpop.f32.mrb[0].mxu0
        %832 = vmatprep.mubr.f32.mxu0 0.0
        %833 = vmatmul.mubr.f32.gmra.mrb[0].mxu0 %v419
        %v834 = vpop.f32.mrb[0].mxu0
        %v835 = vadd.f32 0.0, %v834
        %v836 = vpop.f32.mrb[0].mxu0
        %837 = vmatprep.mubr.f32.mxu0 0.0
        %838 = vmatmul.mubr.f32.gmra.mrb[0].mxu0 %v422
        %v839 = vpop.f32.mrb[0].mxu0
        %v840 = vadd.f32 0.0, %v839
        %v841 = vpop.f32.mrb[0].mxu0
        %842 = vmatprep.mubr.f32.mxu0 0.0
        %843 = vmatmul.mubr.f32.gmra.mrb[0].mxu0 %v425
        %v844 = vpop.f32.mrb[0].mxu0
        %v845 = vadd.f32 0.0, %v844
        %v846 = vpop.f32.mrb[0].mxu0
        %847 = vmatprep.mubr.f32.mxu0 0.0
        %848 = vmatmul.mubr.f32.gmra.mrb[0].mxu0 %v428
        %v849 = vpop.f32.mrb[0].mxu0
        %v850 = vadd.f32 0.0, %v849
        %v851 = vpop.f32.mrb[0].mxu0
        %852 = vmatprep.mubr.f32.mxu0 0.0
        %853 = vmatmul.mubr.f32.gmra.mrb[0].mxu0 %v431
        %v854 = vpop.f32.mrb[0].mxu0
        %v855 = vadd.f32 0.0, %v854
        %v856 = vpop.f32.mrb[0].mxu0
        %857 = vmatprep.mubr.f32.mxu0 0.0
        %858 = vmatmul.mubr.f32.gmra.mrb[0].mxu0 %v434
        %v859 = vpop.f32.mrb[0].mxu0
        %v860 = vadd.f32 0.0, %v859
        %v861 = vpop.f32.mrb[0].mxu0
        %862 = vmatprep.mubr.f32.mxu0 0.0
        %863 = vmatmul.mubr.f32.gmra.mrb[0].mxu0 %v437
        %v864 = vpop.f32.mrb[0].mxu0
        %v865 = vadd.f32 0.0, %v864
        %v866 = vpop.f32.mrb[0].mxu0
        %867 = vmatprep.mubr.f32.mxu0 0.0
        %868 = vmatmul.mubr.f32.gmra.mrb[0].mxu0 %v440
        %v869 = vpop.f32.mrb[0].mxu0
        %v870 = vadd.f32 0.0, %v869
        %v871 = vpop.f32.mrb[0].mxu0
        %872 = vmatprep.mubr.f32.mxu0 0.0
        %873 = vmatmul.mubr.f32.gmra.mrb[0].mxu0 %v443
        %v874 = vpop.f32.mrb[0].mxu0
        %v875 = vadd.f32 0.0, %v874
        %v876 = vpop.f32.mrb[0].mxu0
        %877 = vdwg.mxu0
        %v878 = vmax.f32 %v560, 0.0
        %v879 = vmax.f32 %v565, 0.0
        %v880 = vmax.f32 %v570, 0.0
        %v881 = vmax.f32 %v575, 0.0
        %v882 = vmax.f32 %v580, 0.0
        %v883 = vmax.f32 %v585, 0.0
        %v884 = vmax.f32 %v590, 0.0
        %v885 = vmax.f32 %v595, 0.0
        %v886 = vmax.f32 %v600, 0.0
        %v887 = vmax.f32 %v605, 0.0
        %v888 = vmax.f32 %v610, 0.0
        %v889 = vmax.f32 %v615, 0.0
        %v890 = vmax.f32 %v620, 0.0
        %v891 = vmax.f32 %v625, 0.0
        %v892 = vmax.f32 %v630, 0.0
        %v893 = vmax.f32 %v635, 0.0
        %v894 = vmax.f32 %v640, 0.0
        %v895 = vmax.f32 %v645, 0.0
        %v896 = vmax.f32 %v650, 0.0
        %v897 = vmax.f32 %v655, 0.0
        %v898 = vmax.f32 %v660, 0.0
        %v899 = vmax.f32 %v665, 0.0
        %v900 = vmax.f32 %v670, 0.0
        %v901 = vmax.f32 %v675, 0.0
        %v902 = vmax.f32 %v680, 0.0
        %v903 = vmax.f32 %v685, 0.0
        %v904 = vmax.f32 %v690, 0.0
        %v905 = vmax.f32 %v695, 0.0
        %v906 = vmax.f32 %v700, 0.0
        %v907 = vmax.f32 %v705, 0.0
        %v908 = vmax.f32 %v710, 0.0
        %v909 = vmax.f32 %v715, 0.0
        %v910 = vmax.f32 %v720, 0.0
        %v911 = vmax.f32 %v725, 0.0
        %v912 = vmax.f32 %v730, 0.0
        %v913 = vmax.f32 %v735, 0.0
        %v914 = vmax.f32 %v740, 0.0
        %v915 = vmax.f32 %v745, 0.0
        %v916 = vmax.f32 %v750, 0.0
        %v917 = vmax.f32 %v755, 0.0
        %v918 = vmax.f32 %v760, 0.0
        %v919 = vmax.f32 %v765, 0.0
        %v920 = vmax.f32 %v770, 0.0
        %v921 = vmax.f32 %v775, 0.0
        %v922 = vmax.f32 %v780, 0.0
        %v923 = vmax.f32 %v785, 0.0
        %v924 = vmax.f32 %v790, 0.0
        %v925 = vmax.f32 %v795, 0.0
        %v926 = vmax.f32 %v800, 0.0
        %v927 = vmax.f32 %v805, 0.0
        %v928 = vmax.f32 %v810, 0.0
        %v929 = vmax.f32 %v815, 0.0
        %v930 = vmax.f32 %v820, 0.0
        %v931 = vmax.f32 %v825, 0.0
        %v932 = vmax.f32 %v830, 0.0
        %v933 = vmax.f32 %v835, 0.0
        %v934 = vmax.f32 %v840, 0.0
        %v935 = vmax.f32 %v845, 0.0
        %v936 = vmax.f32 %v850, 0.0
        %v937 = vmax.f32 %v855, 0.0
        %v938 = vmax.f32 %v860, 0.0
        %v939 = vmax.f32 %v865, 0.0
        %v940 = vmax.f32 %v870, 0.0
        %v941 = vmax.f32 %v875, 0.0
        %v942 = vld [vmem:[%s2] sm:$0xff]
        %v943 = vld [vmem:[%s2 + $0x8] sm:$0xff]
        %v944 = vld [vmem:[%s2 + $0x10] sm:$0xff]
        %v945 = vld [vmem:[%s2 + $0x18] sm:$0xff]
        %v946 = vld [vmem:[%s2 + $0x20] sm:$0xff]
        %v947 = vld [vmem:[%s2 + $0x28] sm:$0xff]
        %v948 = vld [vmem:[%s2 + $0x30] sm:$0xff]
        %v949 = vld [vmem:[%s2 + $0x38] sm:$0xff]
        %v950 = vld [vmem:[%s2 + $0x40] sm:$0xff]
        %v951 = vld [vmem:[%s2 + $0x48] sm:$0xff]
        %v952 = vld [vmem:[%s2 + $0x50] sm:$0xff]
        %v953 = vld [vmem:[%s2 + $0x58] sm:$0xff]
        %v954 = vld [vmem:[%s2 + $0x60] sm:$0xff]
        %v955 = vld [vmem:[%s2 + $0x68] sm:$0xff]
        %v956 = vld [vmem:[%s2 + $0x70] sm:$0xff]
        %v957 = vld [vmem:[%s2 + $0x78] sm:$0xff]
        %958 = vmatprep.subr.mxu0 0.0
        %959 = vmatpush1.xpose.msra.mxu0 %v942
        %960 = vmatprep.subr.mxu0 0.0
        %961 = vmatpush1.xpose.msra.mxu0 %v943
        %962 = vmatprep.subr.mxu0 0.0
        %963 = vmatpush1.xpose.msra.mxu0 %v944
        %964 = vmatprep.subr.mxu0 0.0
        %965 = vmatpush1.xpose.msra.mxu0 %v945
        %966 = vmatprep.subr.mxu0 0.0
        %967 = vmatpush1.xpose.msra.mxu0 %v946
        %968 = vmatprep.subr.mxu0 0.0
        %969 = vmatpush1.xpose.msra.mxu0 %v947
        %970 = vmatprep.subr.mxu0 0.0
        %971 = vmatpush1.xpose.msra.mxu0 %v948
        %972 = vmatprep.subr.mxu0 0.0
        %973 = vmatpush1.xpose.msra.mxu0 %v949
        %974 = vmatprep.subr.mxu0 0.0
        %975 = vmatpush1.xpose.msra.mxu0 %v950
        %976 = vmatprep.subr.mxu0 0.0
        %977 = vmatpush1.xpose.msra.mxu0 %v951
        %978 = vmatprep.subr.mxu0 0.0
        %979 = vmatpush1.xpose.msra.mxu0 %v952
        %980 = vmatprep.subr.mxu0 0.0
        %981 = vmatpush1.xpose.msra.mxu0 %v953
        %982 = vmatprep.subr.mxu0 0.0
        %983 = vmatpush1.xpose.msra.mxu0 %v954
        %984 = vmatprep.subr.mxu0 0.0
        %985 = vmatpush1.xpose.msra.mxu0 %v955
        %986 = vmatprep.subr.mxu0 0.0
        %987 = vmatpush1.xpose.msra.mxu0 %v956
        %988 = vmatprep.subr.mxu0 0.0
        %989 = vmatpush1.xpose.msra.mxu0 %v957
        %990 = vmatprep.subr.mxu0 0.0
        %991 = vmatpush1.xpose.msra.mxu0 0.0
        %992 = vmatprep.subr.mxu0 0.0
        %993 = vmatpush1.xpose.msra.mxu0 0.0
        %994 = vmatprep.subr.mxu0 0.0
        %995 = vmatpush1.xpose.msra.mxu0 0.0
        %996 = vmatprep.subr.mxu0 0.0
        %997 = vmatpush1.xpose.msra.mxu0 0.0
        %998 = vmatprep.subr.mxu0 0.0
        %999 = vmatpush1.xpose.msra.mxu0 0.0
        %1000 = vmatprep.subr.mxu0 0.0
        %1001 = vmatpush1.xpose.msra.mxu0 0.0
        %1002 = vmatprep.subr.mxu0 0.0
        %1003 = vmatpush1.xpose.msra.mxu0 0.0
        %1004 = vmatprep.subr.mxu0 0.0
        %1005 = vmatpush1.xpose.msra.mxu0 0.0
        %1006 = vmatprep.subr.mxu0 0.0
        %1007 = vmatpush1.xpose.msra.mxu0 0.0
        %1008 = vmatprep.subr.mxu0 0.0
        %1009 = vmatpush1.xpose.msra.mxu0 0.0
        %1010 = vmatprep.subr.mxu0 0.0
        %1011 = vmatpush1.xpose.msra.mxu0 0.0
        %1012 = vmatprep.subr.mxu0 0.0
        %1013 = vmatpush1.xpose.msra.mxu0 0.0
        %1014 = vmatprep.subr.mxu0 0.0
        %1015 = vmatpush1.xpose.msra.mxu0 0.0
        %1016 = vmatprep.subr.mxu0 0.0
        %1017 = vmatpush1.xpose.msra.mxu0 0.0
        %1018 = vmatprep.subr.mxu0 0.0
        %1019 = vmatpush1.xpose.msra.mxu0 0.0
        %1020 = vmatprep.subr.mxu0 0.0
        %1021 = vmatpush1.xpose.msra.mxu0 0.0
        %1022 = vmatprep.mubr.f32.mxu0 0.0
        %1023 = vmatmul.mubr.f32.gmra.mrb[0].mxu0 %v878
        %v1024 = vpop.f32.mrb[0].mxu0
        %v1025 = vadd.f32 0.0, %v1024
        %v1026 = vpop.f32.mrb[0].mxu0
        %1027 = vmatprep.mubr.f32.mxu0 0.0
        %1028 = vmatmul.mubr.f32.gmra.mrb[0].mxu0 %v879
        %v1029 = vpop.f32.mrb[0].mxu0
        %v1030 = vadd.f32 0.0, %v1029
        %v1031 = vpop.f32.mrb[0].mxu0
        %1032 = vmatprep.mubr.f32.mxu0 0.0
        %1033 = vmatmul.mubr.f32.gmra.mrb[0].mxu0 %v880
        %v1034 = vpop.f32.mrb[0].mxu0
        %v1035 = vadd.f32 0.0, %v1034
        %v1036 = vpop.f32.mrb[0].mxu0
        %1037 = vmatprep.mubr.f32.mxu0 0.0
        %1038 = vmatmul.mubr.f32.gmra.mrb[0].mxu0 %v881
        %v1039 = vpop.f32.mrb[0].mxu0
        %v1040 = vadd.f32 0.0, %v1039
        %v1041 = vpop.f32.mrb[0].mxu0
        %1042 = vmatprep.mubr.f32.mxu0 0.0
        %1043 = vmatmul.mubr.f32.gmra.mrb[0].mxu0 %v882
        %v1044 = vpop.f32.mrb[0].mxu0
        %v1045 = vadd.f32 0.0, %v1044
        %v1046 = vpop.f32.mrb[0].mxu0
        %1047 = vmatprep.mubr.f32.mxu0 0.0
        %1048 = vmatmul.mubr.f32.gmra.mrb[0].mxu0 %v883
        %v1049 = vpop.f32.mrb[0].mxu0
        %v1050 = vadd.f32 0.0, %v1049
        %v1051 = vpop.f32.mrb[0].mxu0
        %1052 = vmatprep.mubr.f32.mxu0 0.0
        %1053 = vmatmul.mubr.f32.gmra.mrb[0].mxu0 %v884
        %v1054 = vpop.f32.mrb[0].mxu0
        %v1055 = vadd.f32 0.0, %v1054
        %v1056 = vpop.f32.mrb[0].mxu0
        %1057 = vmatprep.mubr.f32.mxu0 0.0
        %1058 = vmatmul.mubr.f32.gmra.mrb[0].mxu0 %v885
        %v1059 = vpop.f32.mrb[0].mxu0
        %v1060 = vadd.f32 0.0, %v1059
        %v1061 = vpop.f32.mrb[0].mxu0
        %1062 = vmatprep.mubr.f32.mxu0 0.0
        %1063 = vmatmul.mubr.f32.gmra.mrb[0].mxu0 %v886
        %v1064 = vpop.f32.mrb[0].mxu0
        %v1065 = vadd.f32 0.0, %v1064
        %v1066 = vpop.f32.mrb[0].mxu0
        %1067 = vmatprep.mubr.f32.mxu0 0.0
        %1068 = vmatmul.mubr.f32.gmra.mrb[0].mxu0 %v887
        %v1069 = vpop.f32.mrb[0].mxu0
        %v1070 = vadd.f32 0.0, %v1069
        %v1071 = vpop.f32.mrb[0].mxu0
        %1072 = vmatprep.mubr.f32.mxu0 0.0
        %1073 = vmatmul.mubr.f32.gmra.mrb[0].mxu0 %v888
        %v1074 = vpop.f32.mrb[0].mxu0
        %v1075 = vadd.f32 0.0, %v1074
        %v1076 = vpop.f32.mrb[0].mxu0
        %1077 = vmatprep.mubr.f32.mxu0 0.0
        %1078 = vmatmul.mubr.f32.gmra.mrb[0].mxu0 %v889
        %v1079 = vpop.f32.mrb[0].mxu0
        %v1080 = vadd.f32 0.0, %v1079
        %v1081 = vpop.f32.mrb[0].mxu0
        %1082 = vmatprep.mubr.f32.mxu0 0.0
        %1083 = vmatmul.mubr.f32.gmra.mrb[0].mxu0 %v890
        %v1084 = vpop.f32.mrb[0].mxu0
        %v1085 = vadd.f32 0.0, %v1084
        %v1086 = vpop.f32.mrb[0].mxu0
        %1087 = vmatprep.mubr.f32.mxu0 0.0
        %1088 = vmatmul.mubr.f32.gmra.mrb[0].mxu0 %v891
        %v1089 = vpop.f32.mrb[0].mxu0
        %v1090 = vadd.f32 0.0, %v1089
        %v1091 = vpop.f32.mrb[0].mxu0
        %1092 = vmatprep.mubr.f32.mxu0 0.0
        %1093 = vmatmul.mubr.f32.gmra.mrb[0].mxu0 %v892
        %v1094 = vpop.f32.mrb[0].mxu0
        %v1095 = vadd.f32 0.0, %v1094
        %v1096 = vpop.f32.mrb[0].mxu0
        %1097 = vmatprep.mubr.f32.mxu0 0.0
        %1098 = vmatmul.mubr.f32.gmra.mrb[0].mxu0 %v893
        %v1099 = vpop.f32.mrb[0].mxu0
        %v1100 = vadd.f32 0.0, %v1099
        %v1101 = vpop.f32.mrb[0].mxu0
        %1102 = vmatprep.mubr.f32.mxu0 0.0
        %1103 = vmatmul.mubr.f32.gmra.mrb[0].mxu0 %v894
        %v1104 = vpop.f32.mrb[0].mxu0
        %v1105 = vadd.f32 0.0, %v1104
        %v1106 = vpop.f32.mrb[0].mxu0
        %1107 = vmatprep.mubr.f32.mxu0 0.0
        %1108 = vmatmul.mubr.f32.gmra.mrb[0].mxu0 %v895
        %v1109 = vpop.f32.mrb[0].mxu0
        %v1110 = vadd.f32 0.0, %v1109
        %v1111 = vpop.f32.mrb[0].mxu0
        %1112 = vmatprep.mubr.f32.mxu0 0.0
        %1113 = vmatmul.mubr.f32.gmra.mrb[0].mxu0 %v896
        %v1114 = vpop.f32.mrb[0].mxu0
        %v1115 = vadd.f32 0.0, %v1114
        %v1116 = vpop.f32.mrb[0].mxu0
        %1117 = vmatprep.mubr.f32.mxu0 0.0
        %1118 = vmatmul.mubr.f32.gmra.mrb[0].mxu0 %v897
        %v1119 = vpop.f32.mrb[0].mxu0
        %v1120 = vadd.f32 0.0, %v1119
        %v1121 = vpop.f32.mrb[0].mxu0
        %1122 = vmatprep.mubr.f32.mxu0 0.0
        %1123 = vmatmul.mubr.f32.gmra.mrb[0].mxu0 %v898
        %v1124 = vpop.f32.mrb[0].mxu0
        %v1125 = vadd.f32 0.0, %v1124
        %v1126 = vpop.f32.mrb[0].mxu0
        %1127 = vmatprep.mubr.f32.mxu0 0.0
        %1128 = vmatmul.mubr.f32.gmra.mrb[0].mxu0 %v899
        %v1129 = vpop.f32.mrb[0].mxu0
        %v1130 = vadd.f32 0.0, %v1129
        %v1131 = vpop.f32.mrb[0].mxu0
        %1132 = vmatprep.mubr.f32.mxu0 0.0
        %1133 = vmatmul.mubr.f32.gmra.mrb[0].mxu0 %v900
        %v1134 = vpop.f32.mrb[0].mxu0
        %v1135 = vadd.f32 0.0, %v1134
        %v1136 = vpop.f32.mrb[0].mxu0
        %1137 = vmatprep.mubr.f32.mxu0 0.0
        %1138 = vmatmul.mubr.f32.gmra.mrb[0].mxu0 %v901
        %v1139 = vpop.f32.mrb[0].mxu0
        %v1140 = vadd.f32 0.0, %v1139
        %v1141 = vpop.f32.mrb[0].mxu0
        %1142 = vmatprep.mubr.f32.mxu0 0.0
        %1143 = vmatmul.mubr.f32.gmra.mrb[0].mxu0 %v902
        %v1144 = vpop.f32.mrb[0].mxu0
        %v1145 = vadd.f32 0.0, %v1144
        %v1146 = vpop.f32.mrb[0].mxu0
        %1147 = vmatprep.mubr.f32.mxu0 0.0
        %1148 = vmatmul.mubr.f32.gmra.mrb[0].mxu0 %v903
        %v1149 = vpop.f32.mrb[0].mxu0
        %v1150 = vadd.f32 0.0, %v1149
        %v1151 = vpop.f32.mrb[0].mxu0
        %1152 = vmatprep.mubr.f32.mxu0 0.0
        %1153 = vmatmul.mubr.f32.gmra.mrb[0].mxu0 %v904
        %v1154 = vpop.f32.mrb[0].mxu0
        %v1155 = vadd.f32 0.0, %v1154
        %v1156 = vpop.f32.mrb[0].mxu0
        %1157 = vmatprep.mubr.f32.mxu0 0.0
        %1158 = vmatmul.mubr.f32.gmra.mrb[0].mxu0 %v905
        %v1159 = vpop.f32.mrb[0].mxu0
        %v1160 = vadd.f32 0.0, %v1159
        %v1161 = vpop.f32.mrb[0].mxu0
        %1162 = vmatprep.mubr.f32.mxu0 0.0
        %1163 = vmatmul.mubr.f32.gmra.mrb[0].mxu0 %v906
        %v1164 = vpop.f32.mrb[0].mxu0
        %v1165 = vadd.f32 0.0, %v1164
        %v1166 = vpop.f32.mrb[0].mxu0
        %1167 = vmatprep.mubr.f32.mxu0 0.0
        %1168 = vmatmul.mubr.f32.gmra.mrb[0].mxu0 %v907
        %v1169 = vpop.f32.mrb[0].mxu0
        %v1170 = vadd.f32 0.0, %v1169
        %v1171 = vpop.f32.mrb[0].mxu0
        %1172 = vmatprep.mubr.f32.mxu0 0.0
        %1173 = vmatmul.mubr.f32.gmra.mrb[0].mxu0 %v908
        %v1174 = vpop.f32.mrb[0].mxu0
        %v1175 = vadd.f32 0.0, %v1174
        %v1176 = vpop.f32.mrb[0].mxu0
        %1177 = vmatprep.mubr.f32.mxu0 0.0
        %1178 = vmatmul.mubr.f32.gmra.mrb[0].mxu0 %v909
        %v1179 = vpop.f32.mrb[0].mxu0
        %v1180 = vadd.f32 0.0, %v1179
        %v1181 = vpop.f32.mrb[0].mxu0
        %1182 = vmatprep.mubr.f32.mxu0 0.0
        %1183 = vmatmul.mubr.f32.gmra.mrb[0].mxu0 %v910
        %v1184 = vpop.f32.mrb[0].mxu0
        %v1185 = vadd.f32 0.0, %v1184
        %v1186 = vpop.f32.mrb[0].mxu0
        %1187 = vmatprep.mubr.f32.mxu0 0.0
        %1188 = vmatmul.mubr.f32.gmra.mrb[0].mxu0 %v911
        %v1189 = vpop.f32.mrb[0].mxu0
        %v1190 = vadd.f32 0.0, %v1189
        %v1191 = vpop.f32.mrb[0].mxu0
        %1192 = vmatprep.mubr.f32.mxu0 0.0
        %1193 = vmatmul.mubr.f32.gmra.mrb[0].mxu0 %v912
        %v1194 = vpop.f32.mrb[0].mxu0
        %v1195 = vadd.f32 0.0, %v1194
        %v1196 = vpop.f32.mrb[0].mxu0
        %1197 = vmatprep.mubr.f32.mxu0 0.0
        %1198 = vmatmul.mubr.f32.gmra.mrb[0].mxu0 %v913
        %v1199 = vpop.f32.mrb[0].mxu0
        %v1200 = vadd.f32 0.0, %v1199
        %v1201 = vpop.f32.mrb[0].mxu0
        %1202 = vmatprep.mubr.f32.mxu0 0.0
        %1203 = vmatmul.mubr.f32.gmra.mrb[0].mxu0 %v914
        %v1204 = vpop.f32.mrb[0].mxu0
        %v1205 = vadd.f32 0.0, %v1204
        %v1206 = vpop.f32.mrb[0].mxu0
        %1207 = vmatprep.mubr.f32.mxu0 0.0
        %1208 = vmatmul.mubr.f32.gmra.mrb[0].mxu0 %v915
        %v1209 = vpop.f32.mrb[0].mxu0
        %v1210 = vadd.f32 0.0, %v1209
        %v1211 = vpop.f32.mrb[0].mxu0
        %1212 = vmatprep.mubr.f32.mxu0 0.0
        %1213 = vmatmul.mubr.f32.gmra.mrb[0].mxu0 %v916
        %v1214 = vpop.f32.mrb[0].mxu0
        %v1215 = vadd.f32 0.0, %v1214
        %v1216 = vpop.f32.mrb[0].mxu0
        %1217 = vmatprep.mubr.f32.mxu0 0.0
        %1218 = vmatmul.mubr.f32.gmra.mrb[0].mxu0 %v917
        %v1219 = vpop.f32.mrb[0].mxu0
        %v1220 = vadd.f32 0.0, %v1219
        %v1221 = vpop.f32.mrb[0].mxu0
        %1222 = vmatprep.mubr.f32.mxu0 0.0
        %1223 = vmatmul.mubr.f32.gmra.mrb[0].mxu0 %v918
        %v1224 = vpop.f32.mrb[0].mxu0
        %v1225 = vadd.f32 0.0, %v1224
        %v1226 = vpop.f32.mrb[0].mxu0
        %1227 = vmatprep.mubr.f32.mxu0 0.0
        %1228 = vmatmul.mubr.f32.gmra.mrb[0].mxu0 %v919
        %v1229 = vpop.f32.mrb[0].mxu0
        %v1230 = vadd.f32 0.0, %v1229
        %v1231 = vpop.f32.mrb[0].mxu0
        %1232 = vmatprep.mubr.f32.mxu0 0.0
        %1233 = vmatmul.mubr.f32.gmra.mrb[0].mxu0 %v920
        %v1234 = vpop.f32.mrb[0].mxu0
        %v1235 = vadd.f32 0.0, %v1234
        %v1236 = vpop.f32.mrb[0].mxu0
        %1237 = vmatprep.mubr.f32.mxu0 0.0
        %1238 = vmatmul.mubr.f32.gmra.mrb[0].mxu0 %v921
        %v1239 = vpop.f32.mrb[0].mxu0
        %v1240 = vadd.f32 0.0, %v1239
        %v1241 = vpop.f32.mrb[0].mxu0
        %1242 = vmatprep.mubr.f32.mxu0 0.0
        %1243 = vmatmul.mubr.f32.gmra.mrb[0].mxu0 %v922
        %v1244 = vpop.f32.mrb[0].mxu0
        %v1245 = vadd.f32 0.0, %v1244
        %v1246 = vpop.f32.mrb[0].mxu0
        %1247 = vmatprep.mubr.f32.mxu0 0.0
        %1248 = vmatmul.mubr.f32.gmra.mrb[0].mxu0 %v923
        %v1249 = vpop.f32.mrb[0].mxu0
        %v1250 = vadd.f32 0.0, %v1249
        %v1251 = vpop.f32.mrb[0].mxu0
        %1252 = vmatprep.mubr.f32.mxu0 0.0
        %1253 = vmatmul.mubr.f32.gmra.mrb[0].mxu0 %v924
        %v1254 = vpop.f32.mrb[0].mxu0
        %v1255 = vadd.f32 0.0, %v1254
        %v1256 = vpop.f32.mrb[0].mxu0
        %1257 = vmatprep.mubr.f32.mxu0 0.0
        %1258 = vmatmul.mubr.f32.gmra.mrb[0].mxu0 %v925
        %v1259 = vpop.f32.mrb[0].mxu0
        %v1260 = vadd.f32 0.0, %v1259
        %v1261 = vpop.f32.mrb[0].mxu0
        %1262 = vmatprep.mubr.f32.mxu0 0.0
        %1263 = vmatmul.mubr.f32.gmra.mrb[0].mxu0 %v926
        %v1264 = vpop.f32.mrb[0].mxu0
        %v1265 = vadd.f32 0.0, %v1264
        %v1266 = vpop.f32.mrb[0].mxu0
        %1267 = vmatprep.mubr.f32.mxu0 0.0
        %1268 = vmatmul.mubr.f32.gmra.mrb[0].mxu0 %v927
        %v1269 = vpop.f32.mrb[0].mxu0
        %v1270 = vadd.f32 0.0, %v1269
        %v1271 = vpop.f32.mrb[0].mxu0
        %1272 = vmatprep.mubr.f32.mxu0 0.0
        %1273 = vmatmul.mubr.f32.gmra.mrb[0].mxu0 %v928
        %v1274 = vpop.f32.mrb[0].mxu0
        %v1275 = vadd.f32 0.0, %v1274
        %v1276 = vpop.f32.mrb[0].mxu0
        %1277 = vmatprep.mubr.f32.mxu0 0.0
        %1278 = vmatmul.mubr.f32.gmra.mrb[0].mxu0 %v929
        %v1279 = vpop.f32.mrb[0].mxu0
        %v1280 = vadd.f32 0.0, %v1279
        %v1281 = vpop.f32.mrb[0].mxu0
        %1282 = vmatprep.mubr.f32.mxu0 0.0
        %1283 = vmatmul.mubr.f32.gmra.mrb[0].mxu0 %v930
        %v1284 = vpop.f32.mrb[0].mxu0
        %v1285 = vadd.f32 0.0, %v1284
        %v1286 = vpop.f32.mrb[0].mxu0
        %1287 = vmatprep.mubr.f32.mxu0 0.0
        %1288 = vmatmul.mubr.f32.gmra.mrb[0].mxu0 %v931
        %v1289 = vpop.f32.mrb[0].mxu0
        %v1290 = vadd.f32 0.0, %v1289
        %v1291 = vpop.f32.mrb[0].mxu0
        %1292 = vmatprep.mubr.f32.mxu0 0.0
        %1293 = vmatmul.mubr.f32.gmra.mrb[0].mxu0 %v932
        %v1294 = vpop.f32.mrb[0].mxu0
        %v1295 = vadd.f32 0.0, %v1294
        %v1296 = vpop.f32.mrb[0].mxu0
        %1297 = vmatprep.mubr.f32.mxu0 0.0
        %1298 = vmatmul.mubr.f32.gmra.mrb[0].mxu0 %v933
        %v1299 = vpop.f32.mrb[0].mxu0
        %v1300 = vadd.f32 0.0, %v1299
        %v1301 = vpop.f32.mrb[0].mxu0
        %1302 = vmatprep.mubr.f32.mxu0 0.0
        %1303 = vmatmul.mubr.f32.gmra.mrb[0].mxu0 %v934
        %v1304 = vpop.f32.mrb[0].mxu0
        %v1305 = vadd.f32 0.0, %v1304
        %v1306 = vpop.f32.mrb[0].mxu0
        %1307 = vmatprep.mubr.f32.mxu0 0.0
        %1308 = vmatmul.mubr.f32.gmra.mrb[0].mxu0 %v935
        %v1309 = vpop.f32.mrb[0].mxu0
        %v1310 = vadd.f32 0.0, %v1309
        %v1311 = vpop.f32.mrb[0].mxu0
        %1312 = vmatprep.mubr.f32.mxu0 0.0
        %1313 = vmatmul.mubr.f32.gmra.mrb[0].mxu0 %v936
        %v1314 = vpop.f32.mrb[0].mxu0
        %v1315 = vadd.f32 0.0, %v1314
        %v1316 = vpop.f32.mrb[0].mxu0
        %1317 = vmatprep.mubr.f32.mxu0 0.0
        %1318 = vmatmul.mubr.f32.gmra.mrb[0].mxu0 %v937
        %v1319 = vpop.f32.mrb[0].mxu0
        %v1320 = vadd.f32 0.0, %v1319
        %v1321 = vpop.f32.mrb[0].mxu0
        %1322 = vmatprep.mubr.f32.mxu0 0.0
        %1323 = vmatmul.mubr.f32.gmra.mrb[0].mxu0 %v938
        %v1324 = vpop.f32.mrb[0].mxu0
        %v1325 = vadd.f32 0.0, %v1324
        %v1326 = vpop.f32.mrb[0].mxu0
        %1327 = vmatprep.mubr.f32.mxu0 0.0
        %1328 = vmatmul.mubr.f32.gmra.mrb[0].mxu0 %v939
        %v1329 = vpop.f32.mrb[0].mxu0
        %v1330 = vadd.f32 0.0, %v1329
        %v1331 = vpop.f32.mrb[0].mxu0
        %1332 = vmatprep.mubr.f32.mxu0 0.0
        %1333 = vmatmul.mubr.f32.gmra.mrb[0].mxu0 %v940
        %v1334 = vpop.f32.mrb[0].mxu0
        %v1335 = vadd.f32 0.0, %v1334
        %v1336 = vpop.f32.mrb[0].mxu0
        %1337 = vmatprep.mubr.f32.mxu0 0.0
        %1338 = vmatmul.mubr.f32.gmra.mrb[0].mxu0 %v941
        %v1339 = vpop.f32.mrb[0].mxu0
        %v1340 = vadd.f32 0.0, %v1339
        %v1341 = vpop.f32.mrb[0].mxu0
        %1342 = vdwg.mxu0
        %1343 = vst [vmem:[%s164] sm:$0xff] %v1025
        %1344 = vst [vmem:[%s164 + $0x8] sm:$0xff] %v1030
        %1345 = vst [vmem:[%s164 + $0x10] sm:$0xff] %v1035
        %1346 = vst [vmem:[%s164 + $0x18] sm:$0xff] %v1040
        %1347 = vst [vmem:[%s164 + $0x20] sm:$0xff] %v1045
        %1348 = vst [vmem:[%s164 + $0x28] sm:$0xff] %v1050
        %1349 = vst [vmem:[%s164 + $0x30] sm:$0xff] %v1055
        %1350 = vst [vmem:[%s164 + $0x38] sm:$0xff] %v1060
        %1351 = vst [vmem:[%s164 + $0x40] sm:$0xff] %v1065
        %1352 = vst [vmem:[%s164 + $0x48] sm:$0xff] %v1070
        %1353 = vst [vmem:[%s164 + $0x50] sm:$0xff] %v1075
        %1354 = vst [vmem:[%s164 + $0x58] sm:$0xff] %v1080
        %1355 = vst [vmem:[%s164 + $0x60] sm:$0xff] %v1085
        %1356 = vst [vmem:[%s164 + $0x68] sm:$0xff] %v1090
        %1357 = vst [vmem:[%s164 + $0x70] sm:$0xff] %v1095
        %1358 = vst [vmem:[%s164 + $0x78] sm:$0xff] %v1100
        %1359 = vst [vmem:[%s164 + $0x80] sm:$0xff] %v1105
        %1360 = vst [vmem:[%s164 + $0x88] sm:$0xff] %v1110
        %1361 = vst [vmem:[%s164 + $0x90] sm:$0xff] %v1115
        %1362 = vst [vmem:[%s164 + $0x98] sm:$0xff] %v1120
        %1363 = vst [vmem:[%s164 + $0xa0] sm:$0xff] %v1125
        %1364 = vst [vmem:[%s164 + $0xa8] sm:$0xff] %v1130
        %1365 = vst [vmem:[%s164 + $0xb0] sm:$0xff] %v1135
        %1366 = vst [vmem:[%s164 + $0xb8] sm:$0xff] %v1140
        %1367 = vst [vmem:[%s164 + $0xc0] sm:$0xff] %v1145
        %1368 = vst [vmem:[%s164 + $0xc8] sm:$0xff] %v1150
        %1369 = vst [vmem:[%s164 + $0xd0] sm:$0xff] %v1155
        %1370 = vst [vmem:[%s164 + $0xd8] sm:$0xff] %v1160
        %1371 = vst [vmem:[%s164 + $0xe0] sm:$0xff] %v1165
        %1372 = vst [vmem:[%s164 + $0xe8] sm:$0xff] %v1170
        %1373 = vst [vmem:[%s164 + $0xf0] sm:$0xff] %v1175
        %1374 = vst [vmem:[%s164 + $0xf8] sm:$0xff] %v1180
        %1375 = vst [vmem:[%s164 + $0x100] sm:$0xff] %v1185
        %1376 = vst [vmem:[%s164 + $0x108] sm:$0xff] %v1190
        %1377 = vst [vmem:[%s164 + $0x110] sm:$0xff] %v1195
        %1378 = vst [vmem:[%s164 + $0x118] sm:$0xff] %v1200
        %1379 = vst [vmem:[%s164 + $0x120] sm:$0xff] %v1205
        %1380 = vst [vmem:[%s164 + $0x128] sm:$0xff] %v1210
        %1381 = vst [vmem:[%s164 + $0x130] sm:$0xff] %v1215
        %1382 = vst [vmem:[%s164 + $0x138] sm:$0xff] %v1220
        %1383 = vst [vmem:[%s164 + $0x140] sm:$0xff] %v1225
        %1384 = vst [vmem:[%s164 + $0x148] sm:$0xff] %v1230
        %1385 = vst [vmem:[%s164 + $0x150] sm:$0xff] %v1235
        %1386 = vst [vmem:[%s164 + $0x158] sm:$0xff] %v1240
        %1387 = vst [vmem:[%s164 + $0x160] sm:$0xff] %v1245
        %1388 = vst [vmem:[%s164 + $0x168] sm:$0xff] %v1250
        %1389 = vst [vmem:[%s164 + $0x170] sm:$0xff] %v1255
        %1390 = vst [vmem:[%s164 + $0x178] sm:$0xff] %v1260
        %1391 = vst [vmem:[%s164 + $0x180] sm:$0xff] %v1265
        %1392 = vst [vmem:[%s164 + $0x188] sm:$0xff] %v1270
        %1393 = vst [vmem:[%s164 + $0x190] sm:$0xff] %v1275
        %1394 = vst [vmem:[%s164 + $0x198] sm:$0xff] %v1280
        %1395 = vst [vmem:[%s164 + $0x1a0] sm:$0xff] %v1285
        %1396 = vst [vmem:[%s164 + $0x1a8] sm:$0xff] %v1290
        %1397 = vst [vmem:[%s164 + $0x1b0] sm:$0xff] %v1295
        %1398 = vst [vmem:[%s164 + $0x1b8] sm:$0xff] %v1300
        %1399 = vst [vmem:[%s164 + $0x1c0] sm:$0xff] %v1305
        %1400 = vst [vmem:[%s164 + $0x1c8] sm:$0xff] %v1310
        %1401 = vst [vmem:[%s164 + $0x1d0] sm:$0xff] %v1315
        %1402 = vst [vmem:[%s164 + $0x1d8] sm:$0xff] %v1320
        %1403 = vst [vmem:[%s164 + $0x1e0] sm:$0xff] %v1325
        %1404 = vst [vmem:[%s164 + $0x1e8] sm:$0xff] %v1330
        %1405 = vst [vmem:[%s164 + $0x1f0] sm:$0xff] %v1335
        %1406 = vst [vmem:[%s164 + $0x1f8] sm:$0xff] %v1340
        %s1407 = sand.u32 %s93, 1
        %s1408 = scalar_lea.sflag [#allocation3], %s1407
        %s1409 = sand.u32 %s93, 1
        %s1410 = smul.addr %s1409, 512
        %s1411 = scalar_lea.vmem [#allocation2], %s1410
        // Predicated region
        $region33: #{position_embedding.1} parent=31 // pred_check
          %p1412 = pneg %p103
        $region34: #{position_embedding.1} parent=31 // pred_check_branch
          %1414 = sbr.rel (%p1412) target = $region36
        $region35: #{position_embedding.1} parent=31 // pred_region
          %s1415 = smul.u32 64, %s17
          %s1417 = ssub.s32 8192, 8192
          %1418 = vsyncadd %s1408, %s1417
          %s1419 = smul.addr %s1415, 128
          %s1420 = scalar_lea.hbm %s3, %s1419
          %s1421 = sshll.u32 %s1411, 4
          %s1422 = int_to_ptr.vmem [resolvable:$true] %s1421
          %1427 = dma.vmem_to_hbm [thread:$0]  %s1422, 8192, %s1420, %s1408, 128, 128, 8
        $region36: #{position_embedding.1} parent=31 // pred_fallthru
          _
      $region32: #{position_embedding.1} parent=5 // pred_fallthru
        _
      %p1428 = scmp.le.s32.totalorder 2, %s12
      // Predicated region
      $region37: #{position_embedding.1} parent=5 // pred_check
        %p1429 = pneg %p1428
      $region38: #{position_embedding.1} parent=5 // pred_check_branch
        %1431 = sbr.rel (%p1429) target = $region40
      $region39: #{position_embedding.1} parent=5 // pred_region
        %s1432 = ssub.s32 %s12, 2
        // Predicated region
        $region41: #{position_embedding.1} parent=39 // pred_check
          %p1433 = pneg %p109
        $region42: #{position_embedding.1} parent=39 // pred_check_branch
          %1435 = sbr.rel (%p1433) target = $region44
        $region43: #{position_embedding.1} parent=39 // pred_region
          %s1436 = sand.u32 %s94, 1
          %s1437 = scalar_lea.sflag [#allocation3], %s1436
          %s1438 = sand.u32 %s94, 1
          %s1439 = smul.addr %s1438, 512
          %s1440 = scalar_lea.vmem [#allocation2], %s1439
          %1441 = dma.done %s1437, 8192
        $region44: #{position_embedding.1} parent=39 // pred_fallthru
          _
      $region40: #{position_embedding.1} parent=5 // pred_fallthru
        _
    $region6: #{position_embedding.1} parent=1 // loop_footer
      %s16 = sadd.s32 1, %s12
    $region7: #{position_embedding.1} parent=1 // loop_footer_branch
      %11 = sbr.rel target = $region3
    $region8: #{position_embedding.1} parent=1 // loop_exit
      _
    %1442 = vsyncpa [#allocation3], 1
    %s1443 = scalar_lea.sflag [#allocation3], 1
    %1444 = vsyncpa %s1443, 1

</llo_original>
